<compile_context>
chip_gen: v7x
topology: tpu7x:2x2x1
jax: 0.10.0
libtpu: 0.0.40
codegen_flags: <defaults>
</compile_context>

<pallas_src>
import math

import jax
import jax.numpy as jnp
from jax.experimental import pallas as pl
from jax.experimental.pallas import tpu as pltpu


# ---------------------------------------------------------------------------
# Kernel 1: dense linear transform   h = x @ W^T + b
# ---------------------------------------------------------------------------
def linear_kernel(x_ref, wt_ref, b_ref, h_ref):
    h = jnp.dot(x_ref[...], wt_ref[...], preferred_element_type=jnp.float32)
    h_ref[...] = (h + b_ref[...]).astype(h_ref.dtype)


# ---------------------------------------------------------------------------
# Kernel 2: neighborhood aggregation   out = adj @ h
#   grid = (row tiles i, contraction tiles k), accumulator in VMEM scratch,
#   all-zero adjacency blocks skipped via the SMEM block mask.
# ---------------------------------------------------------------------------
def agg_kernel(mask_ref, adj_ref, h_ref, out_ref, acc_ref):
    i = pl.program_id(0)
    k = pl.program_id(1)

    @pl.when(k == 0)
    def _init():
        acc_ref[...] = jnp.zeros_like(acc_ref)

    @pl.when(mask_ref[i, k] != 0)          # skip MXU work on all-zero blocks
    def _accumulate():
        adj_blk = adj_ref[...].astype(jnp.float32)   # bf16 -> f32 (0/1, exact)
        acc_ref[...] += jnp.dot(adj_blk, h_ref[...],
                                preferred_element_type=jnp.float32)

    @pl.when(k == pl.num_programs(1) - 1)
    def _finalize():
        out_ref[...] = acc_ref[...].astype(out_ref.dtype)


# ---------------------------------------------------------------------------
# Tile-size helpers (VMEM-budget friendly on v5e/v6e/v7x, (8,128) legal)
# ---------------------------------------------------------------------------
def _pick_row_tile(n, preferred=256):
    """Sublane-axis tile: multiple of 8 that divides n, or the full extent."""
    for t in (preferred, 512, 256, 128, 64, 32, 16, 8):
        if t <= n and n % t == 0:
            return t
    return n


def _pick_lane_tile(n, preferred=512):
    """Lane-axis tile: multiple of 128 that divides n, or the full extent."""
    for t in (preferred, 1024, 512, 256, 128):
        if t <= n and n % t == 0:
            return t
    return n


# ---------------------------------------------------------------------------
# One-time packing (hoisted out of the forward pass)
# ---------------------------------------------------------------------------
def pack_params(W, b):
    """W: [out_dim, in_dim] (torch nn.Linear) -> Wt: [in_dim, out_dim];
       b: [out_dim] -> b_row: [1, out_dim]."""
    return jnp.asarray(W).T, jnp.asarray(b).reshape(1, -1)


def pack_adj(adj, tm=None, tk=None):
    """Dense adjacency preprocessing: bf16 storage (exact for 0/1 values) and
    a per-(row-tile, k-tile) nonzero mask used for block-level skipping."""
    N = adj.shape[0]
    assert adj.shape == (N, N)
    tm = _pick_row_tile(N) if tm is None else tm
    tk = _pick_lane_tile(N) if tk is None else tk
    assert N % tm == 0 and N % tk == 0, (N, tm, tk)
    ni, nk = N // tm, N // tk
    blocks = adj.reshape(ni, tm, nk, tk)
    block_mask = (jnp.abs(blocks).max(axis=(1, 3)) > 0).astype(jnp.int32)
    return adj.astype(jnp.bfloat16), block_mask


# ---------------------------------------------------------------------------
# Forward pass
# ---------------------------------------------------------------------------
def q_gcn_forward(x, adj_bf16, block_mask, Wt, b_row):
    """x: [N, in_dim], adj_bf16: [N, N] (bf16 dense form of the sparse adj),
    block_mask: [N//tm, N//tk] int32, Wt: [in_dim, out_dim], b_row: [1, out_dim]."""
    N, in_dim = x.shape
    out_dim = Wt.shape[1]
    ni, nk = block_mask.shape
    tm, tk = N // ni, N // nk

    # --- stage 1: h = x @ W^T + b  (row-tiled, megacore-parallel) ----------
    tl = _pick_row_tile(N, preferred=256)
    h = pl.pallas_call(
        linear_kernel,
        out_shape=jax.ShapeDtypeStruct((N, out_dim), jnp.float32),
        grid_spec=pltpu.PrefetchScalarGridSpec(
            num_scalar_prefetch=0,
            grid=(N // tl,),
            in_specs=[
                pl.BlockSpec((tl, in_dim), lambda i: (i, 0)),
                pl.BlockSpec((in_dim, out_dim), lambda i: (0, 0)),
                pl.BlockSpec((1, out_dim), lambda i: (0, 0)),
            ],
            out_specs=pl.BlockSpec((tl, out_dim), lambda i: (i, 0)),
        ),
        compiler_params=pltpu.CompilerParams(
            dimension_semantics=("parallel",)),
    )(x, Wt, b_row)

    # --- stage 2: out = adj @ h  (tiled, accumulated, block-sparse skip) ---
    flops = 2 * N * N * out_dim
    bytes_accessed = (N * N * 2              # adj (bf16)
                      + ni * N * out_dim * 4  # h re-read per row tile
                      + N * out_dim * 4)      # out
    out = pl.pallas_call(
        agg_kernel,
        out_shape=jax.ShapeDtypeStruct((N, out_dim), jnp.float32),
        grid_spec=pltpu.PrefetchScalarGridSpec(
            num_scalar_prefetch=1,            # block_mask -> SMEM
            grid=(ni, nk),
            in_specs=[
                pl.BlockSpec((tm, tk), lambda i, k, m: (i, k)),        # adj
                pl.BlockSpec((tk, out_dim), lambda i, k, m: (k, 0)),   # h
            ],
            out_specs=pl.BlockSpec((tm, out_dim), lambda i, k, m: (i, 0)),
            scratch_shapes=[pltpu.VMEM((tm, out_dim), jnp.float32)],
        ),
        compiler_params=pltpu.CompilerParams(
            dimension_semantics=("parallel", "arbitrary")),
        cost_estimate=pl.CostEstimate(
            flops=flops, transcendentals=0, bytes_accessed=bytes_accessed),
    )(block_mask, adj_bf16, h)
    return out


# ---------------------------------------------------------------------------
# Reference & init
# ---------------------------------------------------------------------------
def init_params(key, in_dim, out_dim):
    """Deterministic init mimicking nn.Linear defaults (uniform +-1/sqrt(fan_in))."""
    kw, kb = jax.random.split(key)
    bound = 1.0 / math.sqrt(in_dim)
    W = jax.random.uniform(kw, (out_dim, in_dim), jnp.float32, -bound, bound)
    b = jax.random.uniform(kb, (out_dim,), jnp.float32, -bound, bound)
    return W, b


def reference_forward(x, adj, W, b):
    h = x @ W.T + b
    return adj @ h


if __name__ == "__main__":
    # Small but grid-exercising shapes: N=256 nodes, 64 -> 128 features.
    # tm=tk=128 gives a 2x2 aggregation grid -> exercises the accumulator
    # k-loop, the parallel row axis, and the block-skip path.
    N, in_dim, out_dim = 256, 64, 128
    tm, tk = 128, 128

    key = jax.random.PRNGKey(0)
    kx, ka, kp = jax.random.split(key, 3)

    x = jax.random.normal(kx, (N, in_dim), jnp.float32)

    # Sparse adjacency (~10% nonzero), materialized densely (numerically
    # identical to torch.sparse.mm).  Zero one full quadrant so at least one
    # adjacency block is all-zero and the block-skip path is exercised.
    adj = (jax.random.uniform(ka, (N, N)) < 0.1).astype(jnp.float32)
    adj = adj.at[:128, 128:].set(0.0)

    W, b = init_params(kp, in_dim, out_dim)

    # One-time packing (hoisted out of the per-call forward pass).
    Wt, b_row = pack_params(W, b)
    adj_bf16, block_mask = pack_adj(adj, tm=tm, tk=tk)

    out = q_gcn_forward(x, adj_bf16, block_mask, Wt, b_row)
    out = jax.block_until_ready(out)

    ref = reference_forward(x, adj, W, b)
    assert out.shape == (N, out_dim), out.shape
    max_err = float(jnp.max(jnp.abs(out - ref)))
    assert jnp.allclose(out, ref, rtol=1e-4, atol=1e-4), max_err

    print("KERNEL_OK")
</pallas_src>

<mosaic_0001>
module attributes {stable_mosaic.version = 11 : i64} {
  func.func @linear_kernel(%arg0: i32, %arg1: memref<256x64xf32, #tpu.memory_space<vmem>>, %arg2: memref<64x128xf32, #tpu.memory_space<vmem>>, %arg3: memref<1x128xf32, #tpu.memory_space<vmem>>, %arg4: memref<256x128xf32, #tpu.memory_space<vmem>>) attributes {dimension_semantics = [#tpu.dimension_semantics<parallel>], iteration_bounds = array<i64: 1>, scalar_prefetch = 0 : i64, scratch_operands = 0 : i64, tpu.core_type = #tpu.core_type<tc>, window_params = [{transform_indices = @transform_0, window_bounds = array<i64: 256, 64>}, {pipeline_mode = #tpu.pipeline_mode<synchronous>, transform_indices = @transform_1, window_bounds = array<i64: 64, 128>}, {pipeline_mode = #tpu.pipeline_mode<synchronous>, transform_indices = @transform_2, window_bounds = array<i64: 1, 128>}, {transform_indices = @transform_3, window_bounds = array<i64: 256, 128>}]} {
    %c0 = arith.constant 0 : index
    %c0_0 = arith.constant 0 : index
    %0 = vector.load %arg1[%c0, %c0_0] : memref<256x64xf32, #tpu.memory_space<vmem>>, vector<256x64xf32>
    %c0_1 = arith.constant 0 : index
    %c0_2 = arith.constant 0 : index
    %1 = vector.load %arg2[%c0_1, %c0_2] : memref<64x128xf32, #tpu.memory_space<vmem>>, vector<64x128xf32>
    %cst = arith.constant dense<0.000000e+00> : vector<256x128xf32>
    %2 = tpu.matmul %0, %1, %cst {dimension_numbers = #tpu.dot_dimension_numbers<[1], [0], [0], [1], [0, 0, 1, 1], [], []>} : vector<256x64xf32>, vector<64x128xf32>, vector<256x128xf32> -> vector<256x128xf32>
    %c0_3 = arith.constant 0 : index
    %c0_4 = arith.constant 0 : index
    %3 = vector.load %arg3[%c0_3, %c0_4] : memref<1x128xf32, #tpu.memory_space<vmem>>, vector<1x128xf32>
    %4 = vector.broadcast %3 : vector<1x128xf32> to vector<256x128xf32>
    %5 = arith.addf %2, %4 : vector<256x128xf32>
    %c0_5 = arith.constant 0 : index
    %c0_6 = arith.constant 0 : index
    %6 = vector.load %arg4[%c0_5, %c0_6] : memref<256x128xf32, #tpu.memory_space<vmem>>, vector<256x128xf32>
    tpu.vector_store %arg4[%c0_5, %c0_6], %5 {strides = array<i32>} : memref<256x128xf32, #tpu.memory_space<vmem>>, vector<256x128xf32>,
    return
  }
  func.func @transform_0(%arg0: i32) -> (i32, i32) {
    %c0_i32 = arith.constant 0 : i32
    %c0_i32_0 = arith.constant 0 : i32
    return %arg0, %c0_i32 : i32, i32
  }
  func.func @transform_1(%arg0: i32) -> (i32, i32) {
    %c0_i32 = arith.constant 0 : i32
    %c0_i32_0 = arith.constant 0 : i32
    %c0_i32_1 = arith.constant 0 : i32
    return %c0_i32, %c0_i32_0 : i32, i32
  }
  func.func @transform_2(%arg0: i32) -> (i32, i32) {
    %c0_i32 = arith.constant 0 : i32
    %c0_i32_0 = arith.constant 0 : i32
    %c0_i32_1 = arith.constant 0 : i32
    return %c0_i32, %c0_i32_0 : i32, i32
  }
  func.func @transform_3(%arg0: i32) -> (i32, i32) {
    %c0_i32 = arith.constant 0 : i32
    %c0_i32_0 = arith.constant 0 : i32
    return %arg0, %c0_i32 : i32, i32
  }
}

</mosaic_0001>

<llo_original>
// kernel: tpu_custom_call.1
$region0: #{tpu_custom_call.1}
  #allocation0 [shape = 'u32[]', space=smem, size = 0x4, offset = 0x4, fixed_abs, tag = 'smem constant byte address 0x4 - core index']
  #allocation1 [shape = 'u32[144,128]{1,0:T(1,128)}', space=vmem, size = 0x12000, scoped, tag = 'internal scratch']
  %s0 = inlined_call_operand.vmem [shape: f32[256,64], index: 0, kind: input, shape index: {}]
  %s1 = inlined_call_operand.vmem [shape: f32[64,128], index: 1, kind: input, shape index: {}]
  %s2 = inlined_call_operand.vmem [shape: f32[1,128], index: 2, kind: input, shape index: {}]
  %s3 = inlined_call_operand.hbm [shape: f32[256,128], index: 3, kind: output, shape index: {}]
  %s4 = sld [smem:[#allocation0]]
  $region22: #{tpu_custom_call.1} parent=0
    _
  %s6 = ssub.s32 1, %s4
  %s7 = scalar_select 0, %s6, %s4
  $region1: #{tpu_custom_call.1} parent=0
    #allocation2 [shape = 'u8[131072]{0}', space=vmem, size = 0x20000, scoped, tag = 'output window, operand 0, single buffered']
    #allocation3 [shape = 's32[1]{0}', space=sflag, size = 0x4, scoped, tag = 'scoped memory for tpu_custom_call.1']
    %8 = vsyncpa [#allocation3], 0
    // Predicated region
    $region2: #{tpu_custom_call.1} parent=1 // pred_check
      _
    $region3: #{tpu_custom_call.1} parent=1 // pred_check_branch
      %10 = sbr.rel (0) target = $region5
    $region4: #{tpu_custom_call.1} parent=1 // pred_region
      _
    $region5: #{tpu_custom_call.1} parent=1 // pred_fallthru
      _
    // Predicated region
    $region6: #{tpu_custom_call.1} parent=1 // pred_check
      _
    $region7: #{tpu_custom_call.1} parent=1 // pred_check_branch
      %12 = sbr.rel (0) target = $region9
    $region8: #{tpu_custom_call.1} parent=1 // pred_region
      _
    $region9: #{tpu_custom_call.1} parent=1 // pred_fallthru
      _
    // Predicated region
    $region10: #{tpu_custom_call.1} parent=1 // pred_check
      _
    $region11: #{tpu_custom_call.1} parent=1 // pred_check_branch
      %14 = sbr.rel (0) target = $region13
    $region12: #{tpu_custom_call.1} parent=1 // pred_region
      _
    $region13: #{tpu_custom_call.1} parent=1 // pred_fallthru
      _
    %v15 = vld [vmem:[%s0] sm:$0xff]
    %v16 = vld [vmem:[%s0 + $0x8] sm:$0xff]
    %v17 = vld [vmem:[%s0 + $0x10] sm:$0xff]
    %v18 = vld [vmem:[%s0 + $0x18] sm:$0xff]
    %v19 = vld [vmem:[%s0 + $0x20] sm:$0xff]
    %v20 = vld [vmem:[%s0 + $0x28] sm:$0xff]
    %v21 = vld [vmem:[%s0 + $0x30] sm:$0xff]
    %v22 = vld [vmem:[%s0 + $0x38] sm:$0xff]
    %v23 = vld [vmem:[%s0 + $0x40] sm:$0xff]
    %v24 = vld [vmem:[%s0 + $0x48] sm:$0xff]
    %v25 = vld [vmem:[%s0 + $0x50] sm:$0xff]
    %v26 = vld [vmem:[%s0 + $0x58] sm:$0xff]
    %v27 = vld [vmem:[%s0 + $0x60] sm:$0xff]
    %v28 = vld [vmem:[%s0 + $0x68] sm:$0xff]
    %v29 = vld [vmem:[%s0 + $0x70] sm:$0xff]
    %v30 = vld [vmem:[%s0 + $0x78] sm:$0xff]
    %v31 = vld [vmem:[%s0 + $0x80] sm:$0xff]
    %v32 = vld [vmem:[%s0 + $0x88] sm:$0xff]
    %v33 = vld [vmem:[%s0 + $0x90] sm:$0xff]
    %v34 = vld [vmem:[%s0 + $0x98] sm:$0xff]
    %v35 = vld [vmem:[%s0 + $0xa0] sm:$0xff]
    %v36 = vld [vmem:[%s0 + $0xa8] sm:$0xff]
    %v37 = vld [vmem:[%s0 + $0xb0] sm:$0xff]
    %v38 = vld [vmem:[%s0 + $0xb8] sm:$0xff]
    %v39 = vld [vmem:[%s0 + $0xc0] sm:$0xff]
    %v40 = vld [vmem:[%s0 + $0xc8] sm:$0xff]
    %v41 = vld [vmem:[%s0 + $0xd0] sm:$0xff]
    %v42 = vld [vmem:[%s0 + $0xd8] sm:$0xff]
    %v43 = vld [vmem:[%s0 + $0xe0] sm:$0xff]
    %v44 = vld [vmem:[%s0 + $0xe8] sm:$0xff]
    %v45 = vld [vmem:[%s0 + $0xf0] sm:$0xff]
    %v46 = vld [vmem:[%s0 + $0xf8] sm:$0xff]
    %v47 = vld [vmem:[%s1] sm:$0xff]
    %v48 = vld [vmem:[%s1 + $0x8] sm:$0xff]
    %v49 = vld [vmem:[%s1 + $0x10] sm:$0xff]
    %v50 = vld [vmem:[%s1 + $0x18] sm:$0xff]
    %v51 = vld [vmem:[%s1 + $0x20] sm:$0xff]
    %v52 = vld [vmem:[%s1 + $0x28] sm:$0xff]
    %v53 = vld [vmem:[%s1 + $0x30] sm:$0xff]
    %v54 = vld [vmem:[%s1 + $0x38] sm:$0xff]
    %v55 = vld [vmem:[%s2] sm:$0x1]
    %v57 = vlaneseq
    %v58 = vshrl.u32 %v57, 7
    %v59 = vsub.s32 0, %v58
    %v60 = vrot.slane %v55, %v59
    %vm62 = vcmask 523264
    %v64 = vsel %vm62, %v15, 0
    %v67 = vsel %vm62, %v16, 0
    %v70 = vsel %vm62, %v17, 0
    %v73 = vsel %vm62, %v18, 0
    %v76 = vsel %vm62, %v19, 0
    %v79 = vsel %vm62, %v20, 0
    %v82 = vsel %vm62, %v21, 0
    %v85 = vsel %vm62, %v22, 0
    %v88 = vsel %vm62, %v23, 0
    %v91 = vsel %vm62, %v24, 0
    %v94 = vsel %vm62, %v25, 0
    %v97 = vsel %vm62, %v26, 0
    %v100 = vsel %vm62, %v27, 0
    %v103 = vsel %vm62, %v28, 0
    %v106 = vsel %vm62, %v29, 0
    %v109 = vsel %vm62, %v30, 0
    %v112 = vsel %vm62, %v31, 0
    %v115 = vsel %vm62, %v32, 0
    %v118 = vsel %vm62, %v33, 0
    %v121 = vsel %vm62, %v34, 0
    %v124 = vsel %vm62, %v35, 0
    %v127 = vsel %vm62, %v36, 0
    %v130 = vsel %vm62, %v37, 0
    %v133 = vsel %vm62, %v38, 0
    %v136 = vsel %vm62, %v39, 0
    %v139 = vsel %vm62, %v40, 0
    %v142 = vsel %vm62, %v41, 0
    %v145 = vsel %vm62, %v42, 0
    %v148 = vsel %vm62, %v43, 0
    %v151 = vsel %vm62, %v44, 0
    %v154 = vsel %vm62, %v45, 0
    %v157 = vsel %vm62, %v46, 0
    %159 = vmatprep.subr.mxu0 0.0
    %160 = vmatpush1.msra.mxu0 %v47
    %161 = vmatprep.subr.mxu0 0.0
    %162 = vmatpush1.msra.mxu0 %v48
    %163 = vmatprep.subr.mxu0 0.0
    %164 = vmatpush1.msra.mxu0 %v49
    %165 = vmatprep.subr.mxu0 0.0
    %166 = vmatpush1.msra.mxu0 %v50
    %167 = vmatprep.subr.mxu0 0.0
    %168 = vmatpush1.msra.mxu0 %v51
    %169 = vmatprep.subr.mxu0 0.0
    %170 = vmatpush1.msra.mxu0 %v52
    %171 = vmatprep.subr.mxu0 0.0
    %172 = vmatpush1.msra.mxu0 %v53
    %173 = vmatprep.subr.mxu0 0.0
    %174 = vmatpush1.msra.mxu0 %v54
    %175 = vmatprep.subr.mxu0 0.0
    %176 = vmatpush1.msra.mxu0 0.0
    %177 = vmatprep.subr.mxu0 0.0
    %178 = vmatpush1.msra.mxu0 0.0
    %179 = vmatprep.subr.mxu0 0.0
    %180 = vmatpush1.msra.mxu0 0.0
    %181 = vmatprep.subr.mxu0 0.0
    %182 = vmatpush1.msra.mxu0 0.0
    %183 = vmatprep.subr.mxu0 0.0
    %184 = vmatpush1.msra.mxu0 0.0
    %185 = vmatprep.subr.mxu0 0.0
    %186 = vmatpush1.msra.mxu0 0.0
    %187 = vmatprep.subr.mxu0 0.0
    %188 = vmatpush1.msra.mxu0 0.0
    %189 = vmatprep.subr.mxu0 0.0
    %190 = vmatpush1.msra.mxu0 0.0
    %191 = vmatprep.subr.mxu0 0.0
    %192 = vmatpush1.msra.mxu0 0.0
    %193 = vmatprep.subr.mxu0 0.0
    %194 = vmatpush1.msra.mxu0 0.0
    %195 = vmatprep.subr.mxu0 0.0
    %196 = vmatpush1.msra.mxu0 0.0
    %197 = vmatprep.subr.mxu0 0.0
    %198 = vmatpush1.msra.mxu0 0.0
    %199 = vmatprep.subr.mxu0 0.0
    %200 = vmatpush1.msra.mxu0 0.0
    %201 = vmatprep.subr.mxu0 0.0
    %202 = vmatpush1.msra.mxu0 0.0
    %203 = vmatprep.subr.mxu0 0.0
    %204 = vmatpush1.msra.mxu0 0.0
    %205 = vmatprep.subr.mxu0 0.0
    %206 = vmatpush1.msra.mxu0 0.0
    %207 = vmatprep.subr.mxu0 0.0
    %208 = vmatpush1.msra.mxu0 0.0
    %209 = vmatprep.subr.mxu0 0.0
    %210 = vmatpush1.msra.mxu0 0.0
    %211 = vmatprep.subr.mxu0 0.0
    %212 = vmatpush1.msra.mxu0 0.0
    %213 = vmatprep.subr.mxu0 0.0
    %214 = vmatpush1.msra.mxu0 0.0
    %215 = vmatprep.subr.mxu0 0.0
    %216 = vmatpush1.msra.mxu0 0.0
    %217 = vmatprep.subr.mxu0 0.0
    %218 = vmatpush1.msra.mxu0 0.0
    %219 = vmatprep.subr.mxu0 0.0
    %220 = vmatpush1.msra.mxu0 0.0
    %221 = vmatprep.subr.mxu0 0.0
    %222 = vmatpush1.msra.mxu0 0.0
    %223 = vmatprep.mubr.f32.mxu0 0.0
    %224 = vmatmul.mubr.f32.gmra.mrb[0].mxu0 %v64
    %v225 = vpop.f32.mrb[0].mxu0
    %v226 = vadd.f32 %v60, %v225
    %v227 = vpop.f32.mrb[0].mxu0
    %228 = vmatprep.mubr.f32.mxu0 0.0
    %229 = vmatmul.mubr.f32.gmra.mrb[0].mxu0 %v67
    %v230 = vpop.f32.mrb[0].mxu0
    %v231 = vadd.f32 %v60, %v230
    %v232 = vpop.f32.mrb[0].mxu0
    %233 = vmatprep.mubr.f32.mxu0 0.0
    %234 = vmatmul.mubr.f32.gmra.mrb[0].mxu0 %v70
    %v235 = vpop.f32.mrb[0].mxu0
    %v236 = vadd.f32 %v60, %v235
    %v237 = vpop.f32.mrb[0].mxu0
    %238 = vmatprep.mubr.f32.mxu0 0.0
    %239 = vmatmul.mubr.f32.gmra.mrb[0].mxu0 %v73
    %v240 = vpop.f32.mrb[0].mxu0
    %v241 = vadd.f32 %v60, %v240
    %v242 = vpop.f32.mrb[0].mxu0
    %243 = vmatprep.mubr.f32.mxu0 0.0
    %244 = vmatmul.mubr.f32.gmra.mrb[0].mxu0 %v76
    %v245 = vpop.f32.mrb[0].mxu0
    %v246 = vadd.f32 %v60, %v245
    %v247 = vpop.f32.mrb[0].mxu0
    %248 = vmatprep.mubr.f32.mxu0 0.0
    %249 = vmatmul.mubr.f32.gmra.mrb[0].mxu0 %v79
    %v250 = vpop.f32.mrb[0].mxu0
    %v251 = vadd.f32 %v60, %v250
    %v252 = vpop.f32.mrb[0].mxu0
    %253 = vmatprep.mubr.f32.mxu0 0.0
    %254 = vmatmul.mubr.f32.gmra.mrb[0].mxu0 %v82
    %v255 = vpop.f32.mrb[0].mxu0
    %v256 = vadd.f32 %v60, %v255
    %v257 = vpop.f32.mrb[0].mxu0
    %258 = vmatprep.mubr.f32.mxu0 0.0
    %259 = vmatmul.mubr.f32.gmra.mrb[0].mxu0 %v85
    %v260 = vpop.f32.mrb[0].mxu0
    %v261 = vadd.f32 %v60, %v260
    %v262 = vpop.f32.mrb[0].mxu0
    %263 = vmatprep.mubr.f32.mxu0 0.0
    %264 = vmatmul.mubr.f32.gmra.mrb[0].mxu0 %v88
    %v265 = vpop.f32.mrb[0].mxu0
    %v266 = vadd.f32 %v60, %v265
    %v267 = vpop.f32.mrb[0].mxu0
    %268 = vmatprep.mubr.f32.mxu0 0.0
    %269 = vmatmul.mubr.f32.gmra.mrb[0].mxu0 %v91
    %v270 = vpop.f32.mrb[0].mxu0
    %v271 = vadd.f32 %v60, %v270
    %v272 = vpop.f32.mrb[0].mxu0
    %273 = vmatprep.mubr.f32.mxu0 0.0
    %274 = vmatmul.mubr.f32.gmra.mrb[0].mxu0 %v94
    %v275 = vpop.f32.mrb[0].mxu0
    %v276 = vadd.f32 %v60, %v275
    %v277 = vpop.f32.mrb[0].mxu0
    %278 = vmatprep.mubr.f32.mxu0 0.0
    %279 = vmatmul.mubr.f32.gmra.mrb[0].mxu0 %v97
    %v280 = vpop.f32.mrb[0].mxu0
    %v281 = vadd.f32 %v60, %v280
    %v282 = vpop.f32.mrb[0].mxu0
    %283 = vmatprep.mubr.f32.mxu0 0.0
    %284 = vmatmul.mubr.f32.gmra.mrb[0].mxu0 %v100
    %v285 = vpop.f32.mrb[0].mxu0
    %v286 = vadd.f32 %v60, %v285
    %v287 = vpop.f32.mrb[0].mxu0
    %288 = vmatprep.mubr.f32.mxu0 0.0
    %289 = vmatmul.mubr.f32.gmra.mrb[0].mxu0 %v103
    %v290 = vpop.f32.mrb[0].mxu0
    %v291 = vadd.f32 %v60, %v290
    %v292 = vpop.f32.mrb[0].mxu0
    %293 = vmatprep.mubr.f32.mxu0 0.0
    %294 = vmatmul.mubr.f32.gmra.mrb[0].mxu0 %v106
    %v295 = vpop.f32.mrb[0].mxu0
    %v296 = vadd.f32 %v60, %v295
    %v297 = vpop.f32.mrb[0].mxu0
    %298 = vmatprep.mubr.f32.mxu0 0.0
    %299 = vmatmul.mubr.f32.gmra.mrb[0].mxu0 %v109
    %v300 = vpop.f32.mrb[0].mxu0
    %v301 = vadd.f32 %v60, %v300
    %v302 = vpop.f32.mrb[0].mxu0
    %303 = vmatprep.mubr.f32.mxu0 0.0
    %304 = vmatmul.mubr.f32.gmra.mrb[0].mxu0 %v112
    %v305 = vpop.f32.mrb[0].mxu0
    %v306 = vadd.f32 %v60, %v305
    %v307 = vpop.f32.mrb[0].mxu0
    %308 = vmatprep.mubr.f32.mxu0 0.0
    %309 = vmatmul.mubr.f32.gmra.mrb[0].mxu0 %v115
    %v310 = vpop.f32.mrb[0].mxu0
    %v311 = vadd.f32 %v60, %v310
    %v312 = vpop.f32.mrb[0].mxu0
    %313 = vmatprep.mubr.f32.mxu0 0.0
    %314 = vmatmul.mubr.f32.gmra.mrb[0].mxu0 %v118
    %v315 = vpop.f32.mrb[0].mxu0
    %v316 = vadd.f32 %v60, %v315
    %v317 = vpop.f32.mrb[0].mxu0
    %318 = vmatprep.mubr.f32.mxu0 0.0
    %319 = vmatmul.mubr.f32.gmra.mrb[0].mxu0 %v121
    %v320 = vpop.f32.mrb[0].mxu0
    %v321 = vadd.f32 %v60, %v320
    %v322 = vpop.f32.mrb[0].mxu0
    %323 = vmatprep.mubr.f32.mxu0 0.0
    %324 = vmatmul.mubr.f32.gmra.mrb[0].mxu0 %v124
    %v325 = vpop.f32.mrb[0].mxu0
    %v326 = vadd.f32 %v60, %v325
    %v327 = vpop.f32.mrb[0].mxu0
    %328 = vmatprep.mubr.f32.mxu0 0.0
    %329 = vmatmul.mubr.f32.gmra.mrb[0].mxu0 %v127
    %v330 = vpop.f32.mrb[0].mxu0
    %v331 = vadd.f32 %v60, %v330
    %v332 = vpop.f32.mrb[0].mxu0
    %333 = vmatprep.mubr.f32.mxu0 0.0
    %334 = vmatmul.mubr.f32.gmra.mrb[0].mxu0 %v130
    %v335 = vpop.f32.mrb[0].mxu0
    %v336 = vadd.f32 %v60, %v335
    %v337 = vpop.f32.mrb[0].mxu0
    %338 = vmatprep.mubr.f32.mxu0 0.0
    %339 = vmatmul.mubr.f32.gmra.mrb[0].mxu0 %v133
    %v340 = vpop.f32.mrb[0].mxu0
    %v341 = vadd.f32 %v60, %v340
    %v342 = vpop.f32.mrb[0].mxu0
    %343 = vmatprep.mubr.f32.mxu0 0.0
    %344 = vmatmul.mubr.f32.gmra.mrb[0].mxu0 %v136
    %v345 = vpop.f32.mrb[0].mxu0
    %v346 = vadd.f32 %v60, %v345
    %v347 = vpop.f32.mrb[0].mxu0
    %348 = vmatprep.mubr.f32.mxu0 0.0
    %349 = vmatmul.mubr.f32.gmra.mrb[0].mxu0 %v139
    %v350 = vpop.f32.mrb[0].mxu0
    %v351 = vadd.f32 %v60, %v350
    %v352 = vpop.f32.mrb[0].mxu0
    %353 = vmatprep.mubr.f32.mxu0 0.0
    %354 = vmatmul.mubr.f32.gmra.mrb[0].mxu0 %v142
    %v355 = vpop.f32.mrb[0].mxu0
    %v356 = vadd.f32 %v60, %v355
    %v357 = vpop.f32.mrb[0].mxu0
    %358 = vmatprep.mubr.f32.mxu0 0.0
    %359 = vmatmul.mubr.f32.gmra.mrb[0].mxu0 %v145
    %v360 = vpop.f32.mrb[0].mxu0
    %v361 = vadd.f32 %v60, %v360
    %v362 = vpop.f32.mrb[0].mxu0
    %363 = vmatprep.mubr.f32.mxu0 0.0
    %364 = vmatmul.mubr.f32.gmra.mrb[0].mxu0 %v148
    %v365 = vpop.f32.mrb[0].mxu0
    %v366 = vadd.f32 %v60, %v365
    %v367 = vpop.f32.mrb[0].mxu0
    %368 = vmatprep.mubr.f32.mxu0 0.0
    %369 = vmatmul.mubr.f32.gmra.mrb[0].mxu0 %v151
    %v370 = vpop.f32.mrb[0].mxu0
    %v371 = vadd.f32 %v60, %v370
    %v372 = vpop.f32.mrb[0].mxu0
    %373 = vmatprep.mubr.f32.mxu0 0.0
    %374 = vmatmul.mubr.f32.gmra.mrb[0].mxu0 %v154
    %v375 = vpop.f32.mrb[0].mxu0
    %v376 = vadd.f32 %v60, %v375
    %v377 = vpop.f32.mrb[0].mxu0
    %378 = vmatprep.mubr.f32.mxu0 0.0
    %379 = vmatmul.mubr.f32.gmra.mrb[0].mxu0 %v157
    %v380 = vpop.f32.mrb[0].mxu0
    %v381 = vadd.f32 %v60, %v380
    %v382 = vpop.f32.mrb[0].mxu0
    %383 = vdwg.mxu0
    %384 = vst [vmem:[#allocation2] sm:$0xff] %v226
    %385 = vst [vmem:[#allocation2 + $0x8] sm:$0xff] %v231
    %386 = vst [vmem:[#allocation2 + $0x10] sm:$0xff] %v236
    %387 = vst [vmem:[#allocation2 + $0x18] sm:$0xff] %v241
    %388 = vst [vmem:[#allocation2 + $0x20] sm:$0xff] %v246
    %389 = vst [vmem:[#allocation2 + $0x28] sm:$0xff] %v251
    %390 = vst [vmem:[#allocation2 + $0x30] sm:$0xff] %v256
    %391 = vst [vmem:[#allocation2 + $0x38] sm:$0xff] %v261
    %392 = vst [vmem:[#allocation2 + $0x40] sm:$0xff] %v266
    %393 = vst [vmem:[#allocation2 + $0x48] sm:$0xff] %v271
    %394 = vst [vmem:[#allocation2 + $0x50] sm:$0xff] %v276
    %395 = vst [vmem:[#allocation2 + $0x58] sm:$0xff] %v281
    %396 = vst [vmem:[#allocation2 + $0x60] sm:$0xff] %v286
    %397 = vst [vmem:[#allocation2 + $0x68] sm:$0xff] %v291
    %398 = vst [vmem:[#allocation2 + $0x70] sm:$0xff] %v296
    %399 = vst [vmem:[#allocation2 + $0x78] sm:$0xff] %v301
    %400 = vst [vmem:[#allocation2 + $0x80] sm:$0xff] %v306
    %401 = vst [vmem:[#allocation2 + $0x88] sm:$0xff] %v311
    %402 = vst [vmem:[#allocation2 + $0x90] sm:$0xff] %v316
    %403 = vst [vmem:[#allocation2 + $0x98] sm:$0xff] %v321
    %404 = vst [vmem:[#allocation2 + $0xa0] sm:$0xff] %v326
    %405 = vst [vmem:[#allocation2 + $0xa8] sm:$0xff] %v331
    %406 = vst [vmem:[#allocation2 + $0xb0] sm:$0xff] %v336
    %407 = vst [vmem:[#allocation2 + $0xb8] sm:$0xff] %v341
    %408 = vst [vmem:[#allocation2 + $0xc0] sm:$0xff] %v346
    %409 = vst [vmem:[#allocation2 + $0xc8] sm:$0xff] %v351
    %410 = vst [vmem:[#allocation2 + $0xd0] sm:$0xff] %v356
    %411 = vst [vmem:[#allocation2 + $0xd8] sm:$0xff] %v361
    %412 = vst [vmem:[#allocation2 + $0xe0] sm:$0xff] %v366
    %413 = vst [vmem:[#allocation2 + $0xe8] sm:$0xff] %v371
    %414 = vst [vmem:[#allocation2 + $0xf0] sm:$0xff] %v376
    %415 = vst [vmem:[#allocation2 + $0xf8] sm:$0xff] %v381
    // Predicated region
    $region14: #{tpu_custom_call.1} parent=1 // pred_check
      _
    $region15: #{tpu_custom_call.1} parent=1 // pred_check_branch
      %417 = sbr.rel (0) target = $region17
    $region16: #{tpu_custom_call.1} parent=1 // pred_region
      %s419 = ssub.s32 4096, 4096
      %420 = vsyncadd [#allocation3], %s419
      %s421 = sshll.u32 [#allocation2], 4
      %s422 = int_to_ptr.vmem [resolvable:$true] %s421
      %427 = dma.vmem_to_hbm [thread:$0]  %s422, 4096, %s3, [#allocation3], 128, 128, 8
    $region17: #{tpu_custom_call.1} parent=1 // pred_fallthru
      _
    // Predicated region
    $region18: #{tpu_custom_call.1} parent=1 // pred_check
      _
    $region19: #{tpu_custom_call.1} parent=1 // pred_check_branch
      %429 = sbr.rel (0) target = $region21
    $region20: #{tpu_custom_call.1} parent=1 // pred_region
      %430 = dma.done [#allocation3], 4096
    $region21: #{tpu_custom_call.1} parent=1 // pred_fallthru
      _
    %431 = vsyncpa [#allocation3], 1

</llo_original>
